<compile_context>
chip_gen: v7x
topology: tpu7x:2x2x1
jax: 0.10.0
libtpu: 0.0.40
codegen_flags: <defaults>
</compile_context>

<pallas_src>
import jax
import jax.numpy as jnp
from jax.experimental import pallas as pl
from jax.experimental.pallas import tpu as pltpu

_MIB = 1024 * 1024


# ----------------------------------------------------------------------------
# Kernels
# ----------------------------------------------------------------------------
def _skip_linear_kernel_f32out(x_lhs_ref, w_ref, b_ref, x_res_ref, o_ref):
    """f32 output: accumulate directly into o_ref (resident across the K axis)."""
    k = pl.program_id(2)

    @pl.when(k == 0)
    def _init():
        # Bias folded into the accumulator init.
        o_ref[...] = jnp.broadcast_to(b_ref[...].astype(jnp.float32), o_ref.shape)

    o_ref[...] += jnp.dot(
        x_lhs_ref[...], w_ref[...], preferred_element_type=jnp.float32
    )

    @pl.when(k == pl.num_programs(2) - 1)
    def _finalize():
        # Residual / skip connection fused in-kernel (f32 add).
        o_ref[...] += x_res_ref[...].astype(jnp.float32)


def _skip_linear_kernel_acc(x_lhs_ref, w_ref, b_ref, x_res_ref, o_ref, acc_ref):
    """Non-f32 output: f32 scratch accumulator, cast once at finalize."""
    k = pl.program_id(2)

    @pl.when(k == 0)
    def _init():
        acc_ref[...] = jnp.broadcast_to(b_ref[...].astype(jnp.float32), acc_ref.shape)

    acc_ref[...] += jnp.dot(
        x_lhs_ref[...], w_ref[...], preferred_element_type=jnp.float32
    )

    @pl.when(k == pl.num_programs(2) - 1)
    def _finalize():
        o_ref[...] = (acc_ref[...] + x_res_ref[...].astype(jnp.float32)).astype(
            o_ref.dtype
        )


# ----------------------------------------------------------------------------
# Tiling helpers
# ----------------------------------------------------------------------------
def _chip_defaults():
    """(tm, tn, tk) preset and VMEM capacity for the current TPU generation."""
    kind = ""
    try:
        kind = jax.devices()[0].device_kind.lower()
    except Exception:
        pass
    tm, tn, tk = 512, 512, 512        # safe default, compute-bound on v5e / v7x
    vmem_cap = 64 * _MIB              # conservative (v7x per-TC VMEM)
    if "v5" in kind:
        tm, tn, tk = 512, 512, 512    # ridge ~240 flops/byte: 512 tiles suffice
        vmem_cap = 128 * _MIB
    elif "v6" in kind or "trillium" in kind:
        tm, tn, tk = 1024, 1024, 512  # ridge ~655 flops/byte on v6e
        vmem_cap = 128 * _MIB
    elif "v7" in kind:
        tm, tn, tk = 512, 512, 512    # 64 MiB VMEM / 3.2 TB/s: 512 tiles suffice
        vmem_cap = 64 * _MIB
    try:  # prefer the real number when available
        vmem_cap = int(pltpu.get_tpu_info().vmem_capacity_bytes)
    except Exception:
        pass
    return (tm, tn, tk), vmem_cap


def _largest_aligned_divisor(h, pref, align=128):
    """Largest lane-aligned divisor of `h` that is <= pref (else h itself)."""
    pref = max(1, min(pref, h))
    if h % pref == 0:
        return pref
    if h % align == 0:
        d = (pref // align) * align
        while d >= align:
            if h % d == 0:
                return d
            d -= align
    return h  # odd H: full extent is still a legal full-dim block


# ----------------------------------------------------------------------------
# Wrapper
# ----------------------------------------------------------------------------
def skip_connection_linear(x, w, b, mask=None, *, tm=None, tn=None, tk=None):
    """out = x + (x @ w + b).   x: [B, S, H], w: [H, H], b: [H].

    `mask` is accepted for API parity with SkipConnection.forward.
    """
    # TODO(synk): in PyTorch `mask` is forwarded to the wrapped module; the
    # synthetic Linear inner module ignores it, so it is unused here.
    B, S, H = x.shape
    M = B * S
    out_dtype = x.dtype

    (tm_d, tn_d, tk_d), vmem_cap = _chip_defaults()
    tn_auto, tk_auto = tn is None, tk is None
    if tm is None:
        tm = tm_d
    if tn is None:
        tn = tn_d
    if tk is None:
        tk = tk_d

    # ---- N / K tiles (must divide H; lane-aligned where possible) -----------
    if H % 128 == 0 and H <= 1024:
        # W (bf16) is small: keep it fully resident, drop the K loop.
        if tk_auto:
            tk = H
        if tn_auto:
            tn = H
    elif H % 128 == 0 and H <= 2048 and tk_auto:
        tk = H  # collapse the K axis; W streams once per row block
    tn = _largest_aligned_divisor(H, tn)
    tk = _largest_aligned_divisor(H, tk)

    # ---- row tile / padding --------------------------------------------------
    row_align = 16  # bf16 LHS sublane packing
    if M < tm:
        tm = max(row_align, ((M + row_align - 1) // row_align) * row_align)
    m_pad = ((M + tm - 1) // tm) * tm
    m_blocks = m_pad // tm

    # Megacore balance (v7x has 2 TCs): with a single row block, let the N axis
    # carry the split.
    if tn_auto and m_blocks == 1 and H // tn == 1 and H >= 256 and (H // 2) % 128 == 0:
        tn = H // 2

    # ---- data prep -----------------------------------------------------------
    x2 = x.reshape(M, H)
    if m_pad != M:  # no-op in the common tile-aligned case
        x2 = jnp.pad(x2, ((0, m_pad - M), (0, 0)))
    b2 = b.reshape(1, H)

    # bf16 MXU feeds (halves LHS/W DMA traffic); accumulation + residual in f32.
    x_lhs = x2 if x2.dtype == jnp.bfloat16 else x2.astype(jnp.bfloat16)
    w_bf16 = w if w.dtype == jnp.bfloat16 else w.astype(jnp.bfloat16)

    grid = (m_blocks, H // tn, H // tk)
    n_blocks, k_blocks = grid[1], grid[2]

    # ---- VMEM budget (double buffers + optional f32 accumulator) -------------
    res_bytes = jnp.dtype(x2.dtype).itemsize
    out_bytes = jnp.dtype(out_dtype).itemsize
    use_scratch = out_dtype != jnp.float32
    vmem_est = (
        2 * tm * tk * 2                # bf16 LHS tiles
        + 2 * tk * tn * 2              # bf16 W tiles
        + 2 * tn * 4                   # bias tiles
        + 2 * tm * tn * res_bytes      # residual tiles
        + 2 * tm * tn * out_bytes      # output tiles
        + (tm * tn * 4 if use_scratch else 0)
    )
    vmem_limit = int(min(max(2 * vmem_est, 32 * _MIB), int(0.85 * vmem_cap)))
    vmem_limit = int(min(max(vmem_limit, int(1.25 * vmem_est)), vmem_cap))

    cost = pl.CostEstimate(
        flops=2 * m_pad * H * H,
        transcendentals=0,
        bytes_accessed=int(
            n_blocks * m_pad * H * 2         # bf16 LHS, re-read per N block
            + m_blocks * H * H * 2           # bf16 W, re-read per M block
            + m_pad * H * res_bytes          # residual read
            + m_pad * H * out_bytes          # output write
            + H * jnp.dtype(b.dtype).itemsize
        ),
    )

    if use_scratch:
        kernel = _skip_linear_kernel_acc
        scratch_shapes = [pltpu.VMEM((tm, tn), jnp.float32)]
    else:
        kernel = _skip_linear_kernel_f32out
        scratch_shapes = []

    out2 = pl.pallas_call(
        kernel,
        out_shape=jax.ShapeDtypeStruct((m_pad, H), out_dtype),
        grid_spec=pltpu.PrefetchScalarGridSpec(
            num_scalar_prefetch=0,
            grid=grid,
            in_specs=[
                pl.BlockSpec((tm, tk), lambda i, j, k: (i, k)),   # bf16 LHS tile
                pl.BlockSpec((tk, tn), lambda i, j, k: (k, j)),   # bf16 W tile
                pl.BlockSpec((1, tn), lambda i, j, k: (0, j)),    # bias row tile
                pl.BlockSpec((tm, tn), lambda i, j, k: (i, j)),   # residual slice
            ],
            out_specs=pl.BlockSpec((tm, tn), lambda i, j, k: (i, j)),
            scratch_shapes=scratch_shapes,
        ),
        compiler_params=pltpu.CompilerParams(
            dimension_semantics=("parallel", "parallel", "arbitrary"),
            vmem_limit_bytes=vmem_limit,
        ),
        cost_estimate=cost,
    )(x_lhs, w_bf16, b2, x2)

    return out2[:M].reshape(B, S, H)


if __name__ == "__main__":
    # Small shapes: H multiple of 128 so lanes stay dense.  Two calls exercise
    # (1) the auto per-chip path (resident W, N-axis megacore split, M padding)
    # and (2) explicit small tiles (K accumulation + N tiling).
    B, S, H = 2, 12, 256

    key = jax.random.PRNGKey(0)
    kx, kw, kb = jax.random.split(key, 3)

    x = jax.random.normal(kx, (B, S, H), dtype=jnp.float32)
    # Deterministic "module" parameters (Linear H -> H); W pre-cast to bf16
    # once, outside the hot path.
    w = (jax.random.normal(kw, (H, H), dtype=jnp.float32) / jnp.sqrt(H)).astype(
        jnp.bfloat16
    )
    b = jax.random.normal(kb, (H,), dtype=jnp.float32) * 0.01

    # Reference (plain JAX) with the same bf16 MXU inputs / f32 accumulation.
    x2 = x.reshape(B * S, H)
    y_ref = jnp.dot(
        x2.astype(jnp.bfloat16), w, preferred_element_type=jnp.float32
    ).reshape(B, S, H)
    ref = x + (y_ref + b)

    out_auto = jax.block_until_ready(skip_connection_linear(x, w, b, mask=None))
    out_tiled = jax.block_until_ready(
        skip_connection_linear(x, w, b, mask=None, tm=32, tn=128, tk=128)
    )

    for out in (out_auto, out_tiled):
        assert out.shape == (B, S, H)
        assert out.dtype == x.dtype
        assert jnp.allclose(out, ref, atol=2e-3, rtol=2e-3), "mismatch vs reference"

    print("KERNEL_OK")
</pallas_src>

<mosaic_0001>
module attributes {stable_mosaic.version = 11 : i64} {
  func.func @_skip_linear_kernel_f32out(%arg0: i32, %arg1: i32, %arg2: i32, %arg3: memref<32x256xbf16, #tpu.memory_space<vmem>>, %arg4: memref<256x128xbf16, #tpu.memory_space<vmem>>, %arg5: memref<1x128xf32, #tpu.memory_space<vmem>>, %arg6: memref<32x128xf32, #tpu.memory_space<vmem>>, %arg7: memref<32x128xf32, #tpu.memory_space<vmem>>) attributes {dimension_semantics = [#tpu.dimension_semantics<parallel>, #tpu.dimension_semantics<parallel>, #tpu.dimension_semantics<arbitrary>], iteration_bounds = array<i64: 1, 2, 1>, scalar_prefetch = 0 : i64, scratch_operands = 0 : i64, tpu.core_type = #tpu.core_type<tc>, window_params = [{transform_indices = @transform_0, window_bounds = array<i64: 32, 256>}, {transform_indices = @transform_1, window_bounds = array<i64: 256, 128>}, {transform_indices = @transform_2, window_bounds = array<i64: 1, 128>}, {transform_indices = @transform_3, window_bounds = array<i64: 32, 128>}, {transform_indices = @transform_4, window_bounds = array<i64: 32, 128>}]} {
    %c0_i32 = arith.constant 0 : i32
    %0 = arith.cmpi eq, %arg2, %c0_i32 : i32
    %1 = arith.extui %0 : i1 to i32
    %c0_i32_0 = arith.constant 0 : i32
    %2 = arith.cmpi ne, %1, %c0_i32_0 : i32
    scf.if %2 {
      %c0_10 = arith.constant 0 : index
      %c0_11 = arith.constant 0 : index
      %12 = vector.load %arg5[%c0_10, %c0_11] : memref<1x128xf32, #tpu.memory_space<vmem>>, vector<1x128xf32>
      %13 = vector.shape_cast %12 : vector<1x128xf32> to vector<1x128xf32>
      %14 = vector.broadcast %13 : vector<1x128xf32> to vector<32x128xf32>
      %c0_12 = arith.constant 0 : index
      %c0_13 = arith.constant 0 : index
      %15 = vector.load %arg7[%c0_12, %c0_13] : memref<32x128xf32, #tpu.memory_space<vmem>>, vector<32x128xf32>
      tpu.vector_store %arg7[%c0_12, %c0_13], %14 {strides = array<i32>} : memref<32x128xf32, #tpu.memory_space<vmem>>, vector<32x128xf32>,
    } else {
    }
    %c0 = arith.constant 0 : index
    %c0_1 = arith.constant 0 : index
    %3 = vector.load %arg7[%c0, %c0_1] : memref<32x128xf32, #tpu.memory_space<vmem>>, vector<32x128xf32>
    %c0_2 = arith.constant 0 : index
    %c0_3 = arith.constant 0 : index
    %4 = vector.load %arg3[%c0_2, %c0_3] : memref<32x256xbf16, #tpu.memory_space<vmem>>, vector<32x256xbf16>
    %c0_4 = arith.constant 0 : index
    %c0_5 = arith.constant 0 : index
    %5 = vector.load %arg4[%c0_4, %c0_5] : memref<256x128xbf16, #tpu.memory_space<vmem>>, vector<256x128xbf16>
    %cst = arith.constant dense<0.000000e+00> : vector<32x128xf32>
    %6 = tpu.matmul %4, %5, %cst {dimension_numbers = #tpu.dot_dimension_numbers<[1], [0], [0], [1], [0, 0, 1, 1], [], []>} : vector<32x256xbf16>, vector<256x128xbf16>, vector<32x128xf32> -> vector<32x128xf32>
    %7 = arith.addf %3, %6 : vector<32x128xf32>
    %c0_6 = arith.constant 0 : index
    %c0_7 = arith.constant 0 : index
    %8 = vector.load %arg7[%c0_6, %c0_7] : memref<32x128xf32, #tpu.memory_space<vmem>>, vector<32x128xf32>
    tpu.vector_store %arg7[%c0_6, %c0_7], %7 {strides = array<i32>} : memref<32x128xf32, #tpu.memory_space<vmem>>, vector<32x128xf32>,
    %c0_i32_8 = arith.constant 0 : i32
    %9 = arith.cmpi eq, %arg2, %c0_i32_8 : i32
    %10 = arith.extui %9 : i1 to i32
    %c0_i32_9 = arith.constant 0 : i32
    %11 = arith.cmpi ne, %10, %c0_i32_9 : i32
    scf.if %11 {
      %c0_10 = arith.constant 0 : index
      %c0_11 = arith.constant 0 : index
      %12 = vector.load %arg7[%c0_10, %c0_11] : memref<32x128xf32, #tpu.memory_space<vmem>>, vector<32x128xf32>
      %c0_12 = arith.constant 0 : index
      %c0_13 = arith.constant 0 : index
      %13 = vector.load %arg6[%c0_12, %c0_13] : memref<32x128xf32, #tpu.memory_space<vmem>>, vector<32x128xf32>
      %14 = arith.addf %12, %13 : vector<32x128xf32>
      %c0_14 = arith.constant 0 : index
      %c0_15 = arith.constant 0 : index
      %15 = vector.load %arg7[%c0_14, %c0_15] : memref<32x128xf32, #tpu.memory_space<vmem>>, vector<32x128xf32>
      tpu.vector_store %arg7[%c0_14, %c0_15], %14 {strides = array<i32>} : memref<32x128xf32, #tpu.memory_space<vmem>>, vector<32x128xf32>,
    } else {
    }
    return
  }
  func.func @transform_0(%arg0: i32, %arg1: i32, %arg2: i32) -> (i32, i32) {
    %c0_i32 = arith.constant 0 : i32
    return %arg0, %arg2 : i32, i32
  }
  func.func @transform_1(%arg0: i32, %arg1: i32, %arg2: i32) -> (i32, i32) {
    %c0_i32 = arith.constant 0 : i32
    return %arg2, %arg1 : i32, i32
  }
  func.func @transform_2(%arg0: i32, %arg1: i32, %arg2: i32) -> (i32, i32) {
    %c0_i32 = arith.constant 0 : i32
    %c0_i32_0 = arith.constant 0 : i32
    return %c0_i32, %arg1 : i32, i32
  }
  func.func @transform_3(%arg0: i32, %arg1: i32, %arg2: i32) -> (i32, i32) {
    %c0_i32 = arith.constant 0 : i32
    return %arg0, %arg1 : i32, i32
  }
  func.func @transform_4(%arg0: i32, %arg1: i32, %arg2: i32) -> (i32, i32) {
    %c0_i32 = arith.constant 0 : i32
    return %arg0, %arg1 : i32, i32
  }
}

</mosaic_0001>

<llo_original>
// kernel: tpu_custom_call.1
$region0: #{tpu_custom_call.1}
  #allocation0 [shape = 'u32[]', space=smem, size = 0x4, offset = 0x4, fixed_abs, tag = 'smem constant byte address 0x4 - core index']
  #allocation1 [shape = 'u32[144,128]{1,0:T(1,128)}', space=vmem, size = 0x12000, scoped, tag = 'internal scratch']
  %s0 = inlined_call_operand.hbm [shape: bf16[32,256], index: 0, kind: input, shape index: {}]
  %s1 = inlined_call_operand.hbm [shape: bf16[256,256], index: 1, kind: input, shape index: {}]
  %s2 = inlined_call_operand.vmem [shape: f32[1,256], index: 2, kind: input, shape index: {}]
  %s3 = inlined_call_operand.hbm [shape: f32[32,256], index: 3, kind: input, shape index: {}]
  %s4 = inlined_call_operand.hbm [shape: f32[32,256], index: 4, kind: output, shape index: {}]
  %s5 = sld [smem:[#allocation0]]
  $region69: #{tpu_custom_call.1} parent=0
    _
  %s7 = ssub.s32 1, %s5
  %s8 = scalar_select 0, %s7, %s5
  $region1: #{tpu_custom_call.1} parent=0
    #allocation2 [shape = 'u8[16384]{0}', space=vmem, size = 0x4000, scoped, tag = 'input window, operand 0, single buffered']
    #allocation3 [shape = 's32[2]{0}', space=sflag, size = 0x8, scoped, tag = 'scoped memory for tpu_custom_call.1']
    #allocation4 [shape = 's32[2]{0}', space=sflag, size = 0x8, scoped, tag = 'scoped memory for tpu_custom_call.1']
    #allocation5 [shape = 'u8[131072]{0}', space=vmem, size = 0x20000, scoped, tag = 'input window, operand 1']
    #allocation6 [shape = 's32[2]{0}', space=sflag, size = 0x8, scoped, tag = 'scoped memory for tpu_custom_call.1']
    #allocation7 [shape = 'u8[32768]{0}', space=vmem, size = 0x8000, scoped, tag = 'input window, operand 3']
    #allocation8 [shape = 'u8[32768]{0}', space=vmem, size = 0x8000, scoped, tag = 'output window, operand 0']
    %9 = vsyncpa [#allocation3], 0
    %10 = vsyncpa [#allocation6], 0
    %s11 = scalar_lea.sflag [#allocation6], 1
    %12 = vsyncpa %s11, 0
    %13 = vsyncpa [#allocation4], 0
    %s14 = scalar_lea.sflag [#allocation4], 1
    %15 = vsyncpa %s14, 0
    loop: start=0, step=1, limit=4
    $region2: #{tpu_custom_call.1} parent=1 // loop_pre_header
      _
    $region3: #{tpu_custom_call.1} parent=1 // loop_header
      %s17 = sphi 0, %s21
      %p18 = scmp.ge.s32.totalorder %s17, 4
      %s24 = sphi 0, %s43
      %s25 = sphi 0, %s39
      %s26 = sphi 0, %s35
      %s27 = sphi 0, %s24
      %s28 = sphi 0, %s25
      %s29 = sphi 0, %s26
      %s30 = sphi 0, %s27
      %s31 = sphi 0, %s28
      %s32 = sphi 0, %s29
      %s48 = sphi 0, %s50
      %s51 = sphi 0, %s48
      %s52 = sphi 0, %s51
      %s68 = sphi 0, %s52
      %s76 = sphi 0, %s78
      %s79 = sphi 0, %s76
      %s80 = sphi 0, %s79
      %s96 = sphi 0, %s80
      %s102 = sphi 0, %s104
      %s105 = sphi 0, %s102
      %s106 = sphi 0, %s105
      %s122 = sphi 0, %s106
      %s130 = sphi 0, %s132
      %s133 = sphi 0, %s130
      %s134 = sphi 0, %s133
      %s150 = sphi 0, %s134
      %s158 = sphi 0, %s160
      %s161 = sphi 0, %s158
      %s162 = sphi 0, %s161
      %s178 = sphi 0, %s162
    $region4: #{tpu_custom_call.1} parent=1 // loop_header_branch
      %20 = sbr.rel (%p18) target = $region8
    $region5: #{tpu_custom_call.1} parent=1 // loop_body
      %s22 = ssub.s32 %s17, 1
      %s23 = ssub.s32 %s17, 2
      %s33 = sadd.s32 1, %s26
      %p34 = scmp.ge.s32.totalorder %s33, 1
      %s35 = scalar_select %p34, 0, %s33
      %s36 = sadd.s32 1, %s25
      %s37 = scalar_select %p34, %s36, %s25
      %p38 = scmp.ge.s32.totalorder %s37, 2
      %s39 = scalar_select %p38, 0, %s37
      %s40 = sadd.s32 1, %s24
      %s41 = scalar_select %p38, %s40, %s24
      %p42 = scmp.ge.s32.totalorder %s41, 1
      %s43 = scalar_select %p42, 0, %s41
      %s44 = ssub.s32 %s24, %s43
      %s45 = ssub.s32 %s26, %s35
      %s46 = sor.u32 %s44, %s45
      %p47 = scmp.eq.s32.totalorder %s46, 0
      %s49 = sadd.s32 %s48, 1
      %s50 = scalar_select %p47, %s48, %s49
      %p53 = pneg %p47
      %p54 = scmp.eq.s32.totalorder %s17, 1
      %p55 = por %p53, %p54
      %p56 = scmp.ne.s32.totalorder %s48, %s51
      %p57 = scmp.eq.s32.totalorder %s17, 0
      %p58 = por %p56, %p57
      %p59 = scmp.ne.s32.totalorder %s48, %s51
      %p60 = scmp.eq.s32.totalorder %s22, 1
      %p61 = por %p59, %p60
      %p62 = scmp.ne.s32.totalorder %s51, %s52
      %p63 = scmp.eq.s32.totalorder %s22, 0
      %p64 = por %p62, %p63
      %p65 = scmp.ne.s32.totalorder %s51, %s52
      %p66 = scmp.eq.s32.totalorder %s23, 1
      %p67 = por %p65, %p66
      %p69 = scmp.ne.s32.totalorder %s52, %s68
      %p70 = scmp.eq.s32.totalorder %s23, 0
      %p71 = por %p69, %p70
      %s72 = ssub.s32 %s26, %s35
      %s73 = ssub.s32 %s25, %s39
      %s74 = sor.u32 %s72, %s73
      %p75 = scmp.eq.s32.totalorder %s74, 0
      %s77 = sadd.s32 %s76, 1
      %s78 = scalar_select %p75, %s76, %s77
      %p81 = pneg %p75
      %p82 = scmp.eq.s32.totalorder %s17, 1
      %p83 = por %p81, %p82
      %p84 = scmp.ne.s32.totalorder %s76, %s79
      %p85 = scmp.eq.s32.totalorder %s17, 0
      %p86 = por %p84, %p85
      %p87 = scmp.ne.s32.totalorder %s76, %s79
      %p88 = scmp.eq.s32.totalorder %s22, 1
      %p89 = por %p87, %p88
      %p90 = scmp.ne.s32.totalorder %s79, %s80
      %p91 = scmp.eq.s32.totalorder %s22, 0
      %p92 = por %p90, %p91
      %p93 = scmp.ne.s32.totalorder %s79, %s80
      %p94 = scmp.eq.s32.totalorder %s23, 1
      %p95 = por %p93, %p94
      %p97 = scmp.ne.s32.totalorder %s80, %s96
      %p98 = scmp.eq.s32.totalorder %s23, 0
      %p99 = por %p97, %p98
      %s100 = ssub.s32 %s25, %s39
      %p101 = scmp.eq.s32.totalorder %s100, 0
      %s103 = sadd.s32 %s102, 1
      %s104 = scalar_select %p101, %s102, %s103
      %p107 = pneg %p101
      %p108 = scmp.eq.s32.totalorder %s17, 1
      %p109 = por %p107, %p108
      %p110 = scmp.ne.s32.totalorder %s102, %s105
      %p111 = scmp.eq.s32.totalorder %s17, 0
      %p112 = por %p110, %p111
      %p113 = scmp.ne.s32.totalorder %s102, %s105
      %p114 = scmp.eq.s32.totalorder %s22, 1
      %p115 = por %p113, %p114
      %p116 = scmp.ne.s32.totalorder %s105, %s106
      %p117 = scmp.eq.s32.totalorder %s22, 0
      %p118 = por %p116, %p117
      %p119 = scmp.ne.s32.totalorder %s105, %s106
      %p120 = scmp.eq.s32.totalorder %s23, 1
      %p121 = por %p119, %p120
      %p123 = scmp.ne.s32.totalorder %s106, %s122
      %p124 = scmp.eq.s32.totalorder %s23, 0
      %p125 = por %p123, %p124
      %s126 = ssub.s32 %s24, %s43
      %s127 = ssub.s32 %s25, %s39
      %s128 = sor.u32 %s126, %s127
      %p129 = scmp.eq.s32.totalorder %s128, 0
      %s131 = sadd.s32 %s130, 1
      %s132 = scalar_select %p129, %s130, %s131
      %p135 = pneg %p129
      %p136 = scmp.eq.s32.totalorder %s17, 1
      %p137 = por %p135, %p136
      %p138 = scmp.ne.s32.totalorder %s130, %s133
      %p139 = scmp.eq.s32.totalorder %s17, 0
      %p140 = por %p138, %p139
      %p141 = scmp.ne.s32.totalorder %s130, %s133
      %p142 = scmp.eq.s32.totalorder %s22, 1
      %p143 = por %p141, %p142
      %p144 = scmp.ne.s32.totalorder %s133, %s134
      %p145 = scmp.eq.s32.totalorder %s22, 0
      %p146 = por %p144, %p145
      %p147 = scmp.ne.s32.totalorder %s133, %s134
      %p148 = scmp.eq.s32.totalorder %s23, 1
      %p149 = por %p147, %p148
      %p151 = scmp.ne.s32.totalorder %s134, %s150
      %p152 = scmp.eq.s32.totalorder %s23, 0
      %p153 = por %p151, %p152
      %s154 = ssub.s32 %s24, %s43
      %s155 = ssub.s32 %s25, %s39
      %s156 = sor.u32 %s154, %s155
      %p157 = scmp.eq.s32.totalorder %s156, 0
      %s159 = sadd.s32 %s158, 1
      %s160 = scalar_select %p157, %s158, %s159
      %p163 = pneg %p157
      %p164 = scmp.eq.s32.totalorder %s17, 1
      %p165 = por %p163, %p164
      %p166 = scmp.ne.s32.totalorder %s158, %s161
      %p167 = scmp.eq.s32.totalorder %s17, 0
      %p168 = por %p166, %p167
      %p169 = scmp.ne.s32.totalorder %s158, %s161
      %p170 = scmp.eq.s32.totalorder %s22, 1
      %p171 = por %p169, %p170
      %p172 = scmp.ne.s32.totalorder %s161, %s162
      %p173 = scmp.eq.s32.totalorder %s22, 0
      %p174 = por %p172, %p173
      %p175 = scmp.ne.s32.totalorder %s161, %s162
      %p176 = scmp.eq.s32.totalorder %s23, 1
      %p177 = por %p175, %p176
      %p179 = scmp.ne.s32.totalorder %s162, %s178
      %p180 = scmp.eq.s32.totalorder %s23, 0
      %p181 = por %p179, %p180
      %p182 = scmp.le.s32.totalorder 1, %s17
      %p183 = scmp.lt.s32.totalorder %s17, 3
      %p184 = pnand %p182, %p183
      %p185 = pneg %p184
      // Predicated region
      $region9: #{tpu_custom_call.1} parent=5 // pred_check
        _
      $region10: #{tpu_custom_call.1} parent=5 // pred_check_branch
        %187 = sbr.rel (%p184) target = $region12
      $region11: #{tpu_custom_call.1} parent=5 // pred_region
        %s188 = ssub.s32 %s17, 1
        // Predicated region
        $region13: #{tpu_custom_call.1} parent=11 // pred_check
          %p189 = pneg %p64
        $region14: #{tpu_custom_call.1} parent=11 // pred_check_branch
          %191 = sbr.rel (%p189) target = $region16
        $region15: #{tpu_custom_call.1} parent=11 // pred_region
          %s192 = smul.u32 4, %s27
          %s193 = smul.u32 2, %s29
          %s195 = ssub.s32 512, 512
          %196 = vsyncadd [#allocation3], %s195
          %s197 = smul.addr %s192, 2
          %s198 = sadd.s32 %s193, %s197
          %s199 = smul.addr %s198, 64
          %s200 = scalar_lea.hbm %s0, %s199
          %s201 = sshll.u32 [#allocation2], 4
          %s202 = int_to_ptr.vmem [resolvable:$true] %s201
          %207 = dma.hbm_to_vmem [thread:$0]  %s200, 512, %s202, [#allocation3], 128, 128, 8
        $region16: #{tpu_custom_call.1} parent=11 // pred_fallthru
          _
      $region12: #{tpu_custom_call.1} parent=5 // pred_fallthru
        _
      %p208 = scmp.lt.s32.totalorder %s17, 2
      // Predicated region
      $region17: #{tpu_custom_call.1} parent=5 // pred_check
        %p209 = pneg %p208
      $region18: #{tpu_custom_call.1} parent=5 // pred_check_branch
        %211 = sbr.rel (%p209) target = $region20
      $region19: #{tpu_custom_call.1} parent=5 // pred_region
        // Predicated region
        $region21: #{tpu_custom_call.1} parent=19 // pred_check
          %p212 = pneg %p86
        $region22: #{tpu_custom_call.1} parent=19 // pred_check_branch
          %214 = sbr.rel (%p212) target = $region24
        $region23: #{tpu_custom_call.1} parent=19 // pred_region
          %s215 = sand.u32 %s17, 1
          %s216 = scalar_lea.sflag [#allocation6], %s215
          %s217 = sand.u32 %s76, 1
          %s218 = smul.addr %s217, 128
          %s219 = scalar_lea.vmem [#allocation5], %s218
          %s220 = smul.u32 32, %s26
          %s222 = ssub.s32 2048, 2048
          %223 = vsyncadd %s216, %s222
          %s224 = smul.addr %s220, 2
          %s225 = sadd.s32 %s25, %s224
          %s226 = smul.addr %s225, 64
          %s227 = scalar_lea.hbm %s1, %s226
          %s228 = sshll.u32 %s219, 4
          %s229 = int_to_ptr.vmem [resolvable:$true] %s228
          %234 = dma.hbm_to_vmem [thread:$0]  %s227, 2048, %s229, %s216, 128, 64, 4
        $region24: #{tpu_custom_call.1} parent=19 // pred_fallthru
          _
        // Predicated region
        $region25: #{tpu_custom_call.1} parent=19 // pred_check
          %p235 = pneg %p112
        $region26: #{tpu_custom_call.1} parent=19 // pred_check_branch
          %237 = sbr.rel (%p235) target = $region28
        $region27: #{tpu_custom_call.1} parent=19 // pred_region
          %p238 = scmp.lt.s32.totalorder %s25, 1
          %s239 = scalar_select %p238, %s25, 1
          %s240 = scalar_lea.vmem %s2, %s239
        $region28: #{tpu_custom_call.1} parent=19 // pred_fallthru
          _
        // Predicated region
        $region29: #{tpu_custom_call.1} parent=19 // pred_check
          %p241 = pneg %p140
        $region30: #{tpu_custom_call.1} parent=19 // pred_check_branch
          %243 = sbr.rel (%p241) target = $region32
        $region31: #{tpu_custom_call.1} parent=19 // pred_region
          %s244 = sand.u32 %s17, 1
          %s245 = scalar_lea.sflag [#allocation6], %s244
          %s246 = sand.u32 %s130, 1
          %s247 = smul.addr %s246, 32
          %s248 = scalar_lea.vmem [#allocation7], %s247
          %s249 = smul.u32 4, %s24
          %s251 = ssub.s32 512, 512
          %252 = vsyncadd %s245, %s251
          %s253 = smul.addr %s249, 2
          %s254 = sadd.s32 %s25, %s253
          %s255 = smul.addr %s254, 128
          %s256 = scalar_lea.hbm %s3, %s255
          %s257 = sshll.u32 %s248, 4
          %s258 = int_to_ptr.vmem [resolvable:$true] %s257
          %263 = dma.hbm_to_vmem [thread:$0]  %s256, 512, %s258, %s245, 256, 128, 8
        $region32: #{tpu_custom_call.1} parent=19 // pred_fallthru
          _
      $region20: #{tpu_custom_call.1} parent=5 // pred_fallthru
        _
      %p264 = scmp.le.s32.totalorder 1, %s17
      %p265 = scmp.lt.s32.totalorder %s17, 3
      %p266 = pnand %p264, %p265
      %p267 = pneg %p266
      // Predicated region
      $region33: #{tpu_custom_call.1} parent=5 // pred_check
        _
      $region34: #{tpu_custom_call.1} parent=5 // pred_check_branch
        %269 = sbr.rel (%p266) target = $region36
      $region35: #{tpu_custom_call.1} parent=5 // pred_region
        %s270 = ssub.s32 %s17, 1
        // Predicated region
        $region37: #{tpu_custom_call.1} parent=35 // pred_check
          %p271 = pneg %p64
        $region38: #{tpu_custom_call.1} parent=35 // pred_check_branch
          %273 = sbr.rel (%p271) target = $region40
        $region39: #{tpu_custom_call.1} parent=35 // pred_region
          %274 = dma.done [#allocation3], 512
        $region40: #{tpu_custom_call.1} parent=35 // pred_fallthru
          _
        %s275 = sand.u32 %s22, 1
        %s276 = scalar_lea.sflag [#allocation6], %s275
        %s277 = sand.u32 %s79, 1
        %s278 = smul.addr %s277, 128
        %s279 = scalar_lea.vmem [#allocation5], %s278
        // Predicated region
        $region41: #{tpu_custom_call.1} parent=35 // pred_check
          %p280 = pneg %p92
        $region42: #{tpu_custom_call.1} parent=35 // pred_check_branch
          %282 = sbr.rel (%p280) target = $region44
        $region43: #{tpu_custom_call.1} parent=35 // pred_region
          %283 = dma.done %s276, 2048
        $region44: #{tpu_custom_call.1} parent=35 // pred_fallthru
          _
        %s284 = sand.u32 %s22, 1
        %s285 = scalar_lea.sflag [#allocation6], %s284
        %s286 = sand.u32 %s133, 1
        %s287 = smul.addr %s286, 32
        %s288 = scalar_lea.vmem [#allocation7], %s287
        // Predicated region
        $region45: #{tpu_custom_call.1} parent=35 // pred_check
          %p289 = pneg %p146
        $region46: #{tpu_custom_call.1} parent=35 // pred_check_branch
          %291 = sbr.rel (%p289) target = $region48
        $region47: #{tpu_custom_call.1} parent=35 // pred_region
          %292 = dma.done %s285, 512
        $region48: #{tpu_custom_call.1} parent=35 // pred_fallthru
          _
        %p293 = pneg %p64
        %p294 = pneg %p61
        %s295 = sand.u32 %s22, 1
        %s296 = scalar_lea.sflag [#allocation6], %s295
        %s297 = sand.u32 %s79, 1
        %s298 = smul.addr %s297, 128
        %s299 = scalar_lea.vmem [#allocation5], %s298
        %p300 = pneg %p92
        %p301 = pneg %p89
        %p302 = scmp.lt.s32.totalorder %s28, 1
        %s303 = scalar_select %p302, %s28, 1
        %s304 = scalar_lea.vmem %s2, %s303
        %p305 = pneg %p118
        %p306 = pneg %p115
        %s307 = sand.u32 %s22, 1
        %s308 = scalar_lea.sflag [#allocation6], %s307
        %s309 = sand.u32 %s133, 1
        %s310 = smul.addr %s309, 32
        %s311 = scalar_lea.vmem [#allocation7], %s310
        %p312 = pneg %p146
        %p313 = pneg %p143
        %p314 = pneg %p174
        %p315 = pneg %p171
        %s316 = sand.u32 %s161, 1
        %s317 = scalar_lea.sflag [#allocation4], %s316
        %s318 = sand.u32 %s161, 1
        %s319 = smul.addr %s318, 32
        %s320 = scalar_lea.vmem [#allocation8], %s319
        %s321 = smul.u32 4, %s27
        %s322 = smul.u32 2, %s29
        %s323 = smul.u32 32, %s29
        %p324 = scmp.lt.s32.totalorder %s28, 1
        %s325 = scalar_select %p324, %s28, 1
        %s326 = scalar_lea.vmem %s2, %s325
        %s327 = smul.u32 4, %s27
        %s328 = smul.u32 4, %s27
        %p330 = scmp.eq.s32.totalorder %s29, 0
        // Predicated region
        $region49: #{tpu_custom_call.1} parent=35 // pred_check
          %p331 = pneg %p330
        $region50: #{tpu_custom_call.1} parent=35 // pred_check_branch
          %333 = sbr.rel (%p331) target = $region52
        $region51: #{tpu_custom_call.1} parent=35 // pred_region
          %v334 = vld [vmem:[%s326] sm:$0x1]
          %v336 = vlaneseq
          %v337 = vshrl.u32 %v336, 7
          %v338 = vsub.s32 0, %v337
          %v339 = vrot.slane %v334, %v338
          %341 = vst [vmem:[%s320] sm:$0xff] %v339
          %342 = vst [vmem:[%s320 + $0x8] sm:$0xff] %v339
          %343 = vst [vmem:[%s320 + $0x10] sm:$0xff] %v339
          %344 = vst [vmem:[%s320 + $0x18] sm:$0xff] %v339
        $region52: #{tpu_custom_call.1} parent=35 // pred_fallthru
          _
        %v345 = vld [vmem:[%s320] sm:$0xff]
        %v346 = vld [vmem:[%s320 + $0x8] sm:$0xff]
        %v347 = vld [vmem:[%s320 + $0x10] sm:$0xff]
        %v348 = vld [vmem:[%s320 + $0x18] sm:$0xff]
        %v349 = vld [vmem:[#allocation2] sm:$0xff]
        %v350 = vld [vmem:[#allocation2 + $0x8] sm:$0xff]
        %v351 = vld [vmem:[#allocation2 + $0x10] sm:$0xff]
        %v352 = vld [vmem:[#allocation2 + $0x18] sm:$0xff]
        %v353 = vld [vmem:[%s279] sm:$0xf]
        %v354 = vld [vmem:[%s279 + $0x4] sm:$0xf]
        %v355 = vld [vmem:[%s279 + $0x8] sm:$0xf]
        %v356 = vld [vmem:[%s279 + $0xc] sm:$0xf]
        %v357 = vld [vmem:[%s279 + $0x10] sm:$0xf]
        %v358 = vld [vmem:[%s279 + $0x14] sm:$0xf]
        %v359 = vld [vmem:[%s279 + $0x18] sm:$0xf]
        %v360 = vld [vmem:[%s279 + $0x1c] sm:$0xf]
        %v361 = vld [vmem:[%s279 + $0x20] sm:$0xf]
        %v362 = vld [vmem:[%s279 + $0x24] sm:$0xf]
        %v363 = vld [vmem:[%s279 + $0x28] sm:$0xf]
        %v364 = vld [vmem:[%s279 + $0x2c] sm:$0xf]
        %v365 = vld [vmem:[%s279 + $0x30] sm:$0xf]
        %v366 = vld [vmem:[%s279 + $0x34] sm:$0xf]
        %v367 = vld [vmem:[%s279 + $0x38] sm:$0xf]
        %v368 = vld [vmem:[%s279 + $0x3c] sm:$0xf]
        %v369 = vld [vmem:[%s279 + $0x40] sm:$0xf]
        %v370 = vld [vmem:[%s279 + $0x44] sm:$0xf]
        %v371 = vld [vmem:[%s279 + $0x48] sm:$0xf]
        %v372 = vld [vmem:[%s279 + $0x4c] sm:$0xf]
        %v373 = vld [vmem:[%s279 + $0x50] sm:$0xf]
        %v374 = vld [vmem:[%s279 + $0x54] sm:$0xf]
        %v375 = vld [vmem:[%s279 + $0x58] sm:$0xf]
        %v376 = vld [vmem:[%s279 + $0x5c] sm:$0xf]
        %v377 = vld [vmem:[%s279 + $0x60] sm:$0xf]
        %v378 = vld [vmem:[%s279 + $0x64] sm:$0xf]
        %v379 = vld [vmem:[%s279 + $0x68] sm:$0xf]
        %v380 = vld [vmem:[%s279 + $0x6c] sm:$0xf]
        %v381 = vld [vmem:[%s279 + $0x70] sm:$0xf]
        %v382 = vld [vmem:[%s279 + $0x74] sm:$0xf]
        %v383 = vld [vmem:[%s279 + $0x78] sm:$0xf]
        %v384 = vld [vmem:[%s279 + $0x7c] sm:$0xf]
        %v389 = vunpack.c.l.b16 %v349
        %v390 = vunpack.c.h.b16 %v349
        %v391 = vunpack.c.l.b16 %v350
        %v392 = vunpack.c.h.b16 %v350
        %v393 = vunpack.c.l.b16 %v351
        %v394 = vunpack.c.h.b16 %v351
        %v395 = vunpack.c.l.b16 %v352
        %v396 = vunpack.c.h.b16 %v352
        %v397 = vpack.c.b16 %v391, %v389
        %v398 = vpack.c.b16 %v392, %v390
        %v399 = vpack.c.b16 %v395, %v393
        %v400 = vpack.c.b16 %v396, %v394
        %v437 = vunpack.c.l.b16 %v353
        %v438 = vunpack.c.l.b16 %v354
        %v439 = vunpack.c.l.b16 %v355
        %v440 = vunpack.c.l.b16 %v356
        %v441 = vunpack.c.l.b16 %v357
        %v442 = vunpack.c.l.b16 %v358
        %v443 = vunpack.c.l.b16 %v359
        %v444 = vunpack.c.l.b16 %v360
        %v445 = vunpack.c.l.b16 %v361
        %v446 = vunpack.c.l.b16 %v362
        %v447 = vunpack.c.l.b16 %v363
        %v448 = vunpack.c.l.b16 %v364
        %v449 = vunpack.c.l.b16 %v365
        %v450 = vunpack.c.l.b16 %v366
        %v451 = vunpack.c.l.b16 %v367
        %v452 = vunpack.c.l.b16 %v368
        %v453 = vunpack.c.l.b16 %v369
        %v454 = vunpack.c.l.b16 %v370
        %v455 = vunpack.c.l.b16 %v371
        %v456 = vunpack.c.l.b16 %v372
        %v457 = vunpack.c.l.b16 %v373
        %v458 = vunpack.c.l.b16 %v374
        %v459 = vunpack.c.l.b16 %v375
        %v460 = vunpack.c.l.b16 %v376
        %v461 = vunpack.c.l.b16 %v377
        %v462 = vunpack.c.l.b16 %v378
        %v463 = vunpack.c.l.b16 %v379
        %v464 = vunpack.c.l.b16 %v380
        %v465 = vunpack.c.l.b16 %v381
        %v466 = vunpack.c.l.b16 %v382
        %v467 = vunpack.c.l.b16 %v383
        %v468 = vunpack.c.l.b16 %v384
        %v469 = vpack.c.b16 %v438, %v437
        %v470 = vpack.c.b16 %v440, %v439
        %v471 = vpack.c.b16 %v442, %v441
        %v472 = vpack.c.b16 %v444, %v443
        %v473 = vpack.c.b16 %v446, %v445
        %v474 = vpack.c.b16 %v448, %v447
        %v475 = vpack.c.b16 %v450, %v449
        %v476 = vpack.c.b16 %v452, %v451
        %v477 = vpack.c.b16 %v454, %v453
        %v478 = vpack.c.b16 %v456, %v455
        %v479 = vpack.c.b16 %v458, %v457
        %v480 = vpack.c.b16 %v460, %v459
        %v481 = vpack.c.b16 %v462, %v461
        %v482 = vpack.c.b16 %v464, %v463
        %v483 = vpack.c.b16 %v466, %v465
        %v484 = vpack.c.b16 %v468, %v467
        %501 = vmatprep.subr.bf16.mxu0 0
        %502 = vmatpush1.bf16.msra.mxu0 %v469
        %503 = vmatprep.subr.bf16.mxu0 0
        %504 = vmatpush1.bf16.msra.mxu0 %v470
        %505 = vmatprep.subr.bf16.mxu0 0
        %506 = vmatpush1.bf16.msra.mxu0 %v471
        %507 = vmatprep.subr.bf16.mxu0 0
        %508 = vmatpush1.bf16.msra.mxu0 %v472
        %509 = vmatprep.subr.bf16.mxu0 0
        %510 = vmatpush1.bf16.msra.mxu0 %v473
        %511 = vmatprep.subr.bf16.mxu0 0
        %512 = vmatpush1.bf16.msra.mxu0 %v474
        %513 = vmatprep.subr.bf16.mxu0 0
        %514 = vmatpush1.bf16.msra.mxu0 %v475
        %515 = vmatprep.subr.bf16.mxu0 0
        %516 = vmatpush1.bf16.msra.mxu0 %v476
        %517 = vmatprep.subr.bf16.mxu0 0
        %518 = vmatpush1.bf16.msra.mxu0 %v477
        %519 = vmatprep.subr.bf16.mxu0 0
        %520 = vmatpush1.bf16.msra.mxu0 %v478
        %521 = vmatprep.subr.bf16.mxu0 0
        %522 = vmatpush1.bf16.msra.mxu0 %v479
        %523 = vmatprep.subr.bf16.mxu0 0
        %524 = vmatpush1.bf16.msra.mxu0 %v480
        %525 = vmatprep.subr.bf16.mxu0 0
        %526 = vmatpush1.bf16.msra.mxu0 %v481
        %527 = vmatprep.subr.bf16.mxu0 0
        %528 = vmatpush1.bf16.msra.mxu0 %v482
        %529 = vmatprep.subr.bf16.mxu0 0
        %530 = vmatpush1.bf16.msra.mxu0 %v483
        %531 = vmatprep.subr.bf16.mxu0 0
        %532 = vmatpush1.bf16.msra.mxu0 %v484
        %533 = vmatprep.mubr.bf16.mxu0 %v398
        %534 = vmatmul.mubr.bf16.gmra.mrb[0].mxu0 %v397
        %v535 = vpop.f32.mrb[0].mxu0
        %v536 = vadd.f32 0.0, %v535
        %v537 = vpop.f32.mrb[0].mxu0
        %v538 = vpop.f32.mrb[0].mxu0
        %v539 = vadd.f32 0.0, %v538
        %v540 = vpop.f32.mrb[0].mxu0
        %541 = vmatprep.mubr.bf16.mxu0 %v400
        %542 = vmatmul.mubr.bf16.gmra.mrb[0].mxu0 %v399
        %v543 = vpop.f32.mrb[0].mxu0
        %v544 = vadd.f32 0.0, %v543
        %v545 = vpop.f32.mrb[0].mxu0
        %v546 = vpop.f32.mrb[0].mxu0
        %v547 = vadd.f32 0.0, %v546
        %v548 = vpop.f32.mrb[0].mxu0
        %549 = vdwg.mxu0
        %v550 = vadd.f32 %v345, %v536
        %v551 = vadd.f32 %v346, %v539
        %v552 = vadd.f32 %v347, %v544
        %v553 = vadd.f32 %v348, %v547
        %554 = vst [vmem:[%s320] sm:$0xff] %v550
        %555 = vst [vmem:[%s320 + $0x8] sm:$0xff] %v551
        %556 = vst [vmem:[%s320 + $0x10] sm:$0xff] %v552
        %557 = vst [vmem:[%s320 + $0x18] sm:$0xff] %v553
        // Predicated region
        $region53: #{tpu_custom_call.1} parent=35 // pred_check
          %p558 = pneg %p330
        $region54: #{tpu_custom_call.1} parent=35 // pred_check_branch
          %560 = sbr.rel (%p558) target = $region56
        $region55: #{tpu_custom_call.1} parent=35 // pred_region
          %v561 = vld [vmem:[%s320] sm:$0xff]
          %v562 = vld [vmem:[%s320 + $0x8] sm:$0xff]
          %v563 = vld [vmem:[%s320 + $0x10] sm:$0xff]
          %v564 = vld [vmem:[%s320 + $0x18] sm:$0xff]
          %v565 = vld [vmem:[%s288] sm:$0xff]
          %v566 = vld [vmem:[%s288 + $0x8] sm:$0xff]
          %v567 = vld [vmem:[%s288 + $0x10] sm:$0xff]
          %v568 = vld [vmem:[%s288 + $0x18] sm:$0xff]
          %v569 = vadd.f32 %v561, %v565
          %v570 = vadd.f32 %v562, %v566
          %v571 = vadd.f32 %v563, %v567
          %v572 = vadd.f32 %v564, %v568
          %573 = vst [vmem:[%s320] sm:$0xff] %v569
          %574 = vst [vmem:[%s320 + $0x8] sm:$0xff] %v570
          %575 = vst [vmem:[%s320 + $0x10] sm:$0xff] %v571
          %576 = vst [vmem:[%s320 + $0x18] sm:$0xff] %v572
        $region56: #{tpu_custom_call.1} parent=35 // pred_fallthru
          _
        %s577 = sand.u32 %s161, 1
        %s578 = scalar_lea.sflag [#allocation4], %s577
        %s579 = sand.u32 %s161, 1
        %s580 = smul.addr %s579, 32
        %s581 = scalar_lea.vmem [#allocation8], %s580
        // Predicated region
        $region57: #{tpu_custom_call.1} parent=35 // pred_check
          %p582 = pneg %p171
        $region58: #{tpu_custom_call.1} parent=35 // pred_check_branch
          %584 = sbr.rel (%p582) target = $region60
        $region59: #{tpu_custom_call.1} parent=35 // pred_region
          %s585 = smul.u32 4, %s27
          %s587 = ssub.s32 512, 512
          %588 = vsyncadd %s578, %s587
          %s589 = smul.addr %s585, 2
          %s590 = sadd.s32 %s28, %s589
          %s591 = smul.addr %s590, 128
          %s592 = scalar_lea.hbm %s4, %s591
          %s593 = sshll.u32 %s581, 4
          %s594 = int_to_ptr.vmem [resolvable:$true] %s593
          %599 = dma.vmem_to_hbm [thread:$0]  %s594, 512, %s592, %s578, 128, 256, 8
        $region60: #{tpu_custom_call.1} parent=35 // pred_fallthru
          _
      $region36: #{tpu_custom_call.1} parent=5 // pred_fallthru
        _
      %p600 = scmp.le.s32.totalorder 2, %s17
      // Predicated region
      $region61: #{tpu_custom_call.1} parent=5 // pred_check
        %p601 = pneg %p600
      $region62: #{tpu_custom_call.1} parent=5 // pred_check_branch
        %603 = sbr.rel (%p601) target = $region64
      $region63: #{tpu_custom_call.1} parent=5 // pred_region
        %s604 = ssub.s32 %s17, 2
        // Predicated region
        $region65: #{tpu_custom_call.1} parent=63 // pred_check
          %p605 = pneg %p177
        $region66: #{tpu_custom_call.1} parent=63 // pred_check_branch
          %607 = sbr.rel (%p605) target = $region68
        $region67: #{tpu_custom_call.1} parent=63 // pred_region
          %s608 = sand.u32 %s162, 1
          %s609 = scalar_lea.sflag [#allocation4], %s608
          %s610 = sand.u32 %s162, 1
          %s611 = smul.addr %s610, 32
          %s612 = scalar_lea.vmem [#allocation8], %s611
          %613 = dma.done %s609, 512
        $region68: #{tpu_custom_call.1} parent=63 // pred_fallthru
          _
      $region64: #{tpu_custom_call.1} parent=5 // pred_fallthru
        _
    $region6: #{tpu_custom_call.1} parent=1 // loop_footer
      %s21 = sadd.s32 1, %s17
    $region7: #{tpu_custom_call.1} parent=1 // loop_footer_branch
      %16 = sbr.rel target = $region3
    $region8: #{tpu_custom_call.1} parent=1 // loop_exit
      _
    %614 = vsyncpa [#allocation3], 1
    %s615 = scalar_lea.sflag [#allocation3], 1
    %616 = vsyncpa %s615, 1
    %617 = vsyncpa [#allocation6], 1
    %s618 = scalar_lea.sflag [#allocation6], 1
    %619 = vsyncpa %s618, 1
    %620 = vsyncpa [#allocation4], 1
    %s621 = scalar_lea.sflag [#allocation4], 1
    %622 = vsyncpa %s621, 1

</llo_original>
